<compile_context>
chip_gen: v7x
topology: tpu7x:2x2x1
jax: 0.10.0
libtpu: 0.0.40
codegen_flags: <defaults>
</compile_context>

<pallas_src>
import math

import jax
import jax.numpy as jnp
from jax.experimental import pallas as pl
from jax.experimental.pallas import tpu as pltpu


_LANE_CANDIDATES = (1024, 512, 256, 128)   # lane-dense last dim (multiple of 128)
_BLOCK_BYTES = 8 * 1024 * 1024             # ~8 MiB per block, any dtype
_MIN_STEPS = 4                             # give v7x's 2 TCs >=2 tiles each if possible
_VMEM_LIMIT = 48 * 1024 * 1024             # safe on v5e/v6e (128 MiB) and v7x (64 MiB)


def _make_kernel(gamma: float):
    g = float(gamma)
    g_is_small_pos_int = (g == int(g)) and (2.0 <= g <= 16.0)

    def kernel(x_ref, o_ref):
        xc = jnp.clip(x_ref[...], 0.0, 1.0)          # two VPU ops vs splat immediates
        if g == 1.0:                                  # module default: no pow at all
            y = xc
        elif g == 0.0:                                # pow(x, 0) == 1 (matches torch)
            y = jnp.ones_like(xc)
        elif g == 0.5:                                # single transcendental
            y = jnp.sqrt(xc)
        elif g_is_small_pos_int:                      # exponentiation by squaring: VPU only
            n = int(g)
            base, y = xc, None
            while n:
                if n & 1:
                    y = base if y is None else y * base
                n >>= 1
                if n:
                    base = base * base
        else:                                         # general gamma: pow in f32
            y = jnp.power(xc.astype(jnp.float32), jnp.float32(g))
        o_ref[...] = y.astype(o_ref.dtype)

    return kernel


def _pick_lane(total: int):
    for lane in _LANE_CANDIDATES:
        if total % lane == 0:
            return lane
    return None


def _pick_rows_per_tile(rows: int, lane: int, itemsize: int) -> int:
    """Rows per tile: ~8 MiB blocks, sublane-aligned, >= _MIN_STEPS grid steps when possible."""
    sub = 8 * max(1, 4 // itemsize)                   # sublane pack granularity per dtype
    if rows <= sub:
        return rows                                   # single full-dim block (allowed)
    budget = max(sub, (_BLOCK_BYTES // (lane * itemsize)) // sub * sub)
    tr = min(budget, pl.cdiv(rows, _MIN_STEPS))
    tr = max(sub, (tr // sub) * sub)                  # align down to sublane multiple
    return min(tr, rows)


def meta_gamma_pooling(x: jax.Array, gamma: float = 1.0, *,
                       prefer_fused_clip: bool = False) -> jax.Array:
    """Elementwise clamp-to-[0,1] then pow(., gamma) == MetaGammaPooling.forward."""
    g = float(gamma)

    if prefer_fused_clip and g == 1.0:
        # pallas_call is a fusion barrier; inside a larger jitted graph a bare clip
        # fuses with neighbouring XLA ops and removes an entire HBM read+write pass.
        return jnp.clip(x, 0.0, 1.0)

    total = math.prod(x.shape)
    lane = _pick_lane(total)
    if lane is None:
        # Ragged fallback (total not a multiple of 128): one fused XLA elementwise
        # pass beats pad + pallas_call + slice (3 full HBM passes).
        return jnp.power(jnp.clip(x, 0.0, 1.0), g).astype(x.dtype)

    rows = total // lane
    itemsize = jnp.dtype(x.dtype).itemsize
    tr = _pick_rows_per_tile(rows, lane, itemsize)
    grid = (pl.cdiv(rows, tr),)                       # partial last block auto-masked

    x2d = x.reshape(rows, lane)                       # lane-dense view; no pad/slice copies

    out2d = pl.pallas_call(
        _make_kernel(g),
        out_shape=jax.ShapeDtypeStruct((rows, lane), x.dtype),
        grid=grid,
        in_specs=[pl.BlockSpec((tr, lane), lambda i: (i, 0))],
        out_specs=pl.BlockSpec((tr, lane), lambda i: (i, 0)),
        compiler_params=pltpu.CompilerParams(
            dimension_semantics=("parallel",),
            vmem_limit_bytes=_VMEM_LIMIT,
        ),
    )(x2d)

    return out2d.reshape(x.shape)


if __name__ == "__main__":
    key = jax.random.PRNGKey(0)
    # NCHW input, values spanning outside [0,1] to exercise the clamp.
    x = jax.random.normal(key, (2, 4, 16, 16), dtype=jnp.float32) * 2.0

    # Module default (self.gamma = 1.0 in __init__).
    y = meta_gamma_pooling(x, gamma=1.0)
    jax.block_until_ready(y)
    ref = jnp.power(jnp.clip(x, 0.0, 1.0), 1.0)
    assert y.shape == x.shape and y.dtype == x.dtype
    assert jnp.allclose(y, ref, atol=1e-6), "mismatch vs reference (gamma=1)"

    # Exercise each specialized kernel path once.
    for g, tol in ((2.0, 1e-6), (3.0, 1e-6), (0.5, 1e-6), (2.5, 1e-5)):
        yg = meta_gamma_pooling(x, gamma=g)
        jax.block_until_ready(yg)
        refg = jnp.power(jnp.clip(x, 0.0, 1.0), g)
        assert jnp.allclose(yg, refg, atol=tol), f"mismatch vs reference (gamma={g})"

    print("KERNEL_OK")
</pallas_src>

<mosaic_0001>
module attributes {stable_mosaic.version = 11 : i64} {
  func.func @kernel(%arg0: i32, %arg1: memref<2x1024xf32, #tpu.memory_space<vmem>>, %arg2: memref<2x1024xf32, #tpu.memory_space<vmem>>) attributes {dimension_semantics = [#tpu.dimension_semantics<parallel>], iteration_bounds = array<i64: 1>, scalar_prefetch = 0 : i64, scratch_operands = 0 : i64, tpu.core_type = #tpu.core_type<tc>, window_params = [{transform_indices = @transform_0, window_bounds = array<i64: 2, 1024>}, {transform_indices = @transform_1, window_bounds = array<i64: 2, 1024>}]} {
    %c0 = arith.constant 0 : index
    %c0_0 = arith.constant 0 : index
    %0 = vector.load %arg1[%c0, %c0_0] : memref<2x1024xf32, #tpu.memory_space<vmem>>, vector<2x1024xf32>
    %cst = arith.constant 0.000000e+00 : f32
    %cst_1 = arith.constant 1.000000e+00 : f32
    %1 = vector.broadcast %cst : f32 to vector<2x1024xf32>
    %2 = arith.maximumf %1, %0 : vector<2x1024xf32>
    %3 = vector.broadcast %cst_1 : f32 to vector<2x1024xf32>
    %4 = arith.minimumf %3, %2 : vector<2x1024xf32>
    %c0_2 = arith.constant 0 : index
    %c0_3 = arith.constant 0 : index
    %5 = vector.load %arg2[%c0_2, %c0_3] : memref<2x1024xf32, #tpu.memory_space<vmem>>, vector<2x1024xf32>
    tpu.vector_store %arg2[%c0_2, %c0_3], %4 {strides = array<i32>} : memref<2x1024xf32, #tpu.memory_space<vmem>>, vector<2x1024xf32>,
    return
  }
  func.func @transform_0(%arg0: i32) -> (i32, i32) {
    %c0_i32 = arith.constant 0 : i32
    %c0_i32_0 = arith.constant 0 : i32
    return %arg0, %c0_i32 : i32, i32
  }
  func.func @transform_1(%arg0: i32) -> (i32, i32) {
    %c0_i32 = arith.constant 0 : i32
    %c0_i32_0 = arith.constant 0 : i32
    return %arg0, %c0_i32 : i32, i32
  }
}

</mosaic_0001>

<llo_original>
// kernel: tpu_custom_call.1
$region0: #{tpu_custom_call.1}
  #allocation0 [shape = 'u32[]', space=smem, size = 0x4, offset = 0x4, fixed_abs, tag = 'smem constant byte address 0x4 - core index']
  #allocation1 [shape = 'u32[144,128]{1,0:T(1,128)}', space=vmem, size = 0x12000, scoped, tag = 'internal scratch']
  %s0 = inlined_call_operand.hbm [shape: f32[2,1024], index: 0, kind: input, shape index: {}]
  %s1 = inlined_call_operand.hbm [shape: f32[2,1024], index: 1, kind: output, shape index: {}]
  %s2 = sld [smem:[#allocation0]]
  $region18: #{tpu_custom_call.1} parent=0
    _
  %s4 = ssub.s32 1, %s2
  %s5 = scalar_select 0, %s4, %s2
  $region1: #{tpu_custom_call.1} parent=0
    #allocation2 [shape = 'u8[8192]{0}', space=vmem, size = 0x2000, scoped, tag = 'input window, operand 0, single buffered']
    #allocation3 [shape = 's32[1]{0}', space=sflag, size = 0x4, scoped, tag = 'scoped memory for tpu_custom_call.1']
    #allocation4 [shape = 's32[1]{0}', space=sflag, size = 0x4, scoped, tag = 'scoped memory for tpu_custom_call.1']
    #allocation5 [shape = 'u8[8192]{0}', space=vmem, size = 0x2000, scoped, tag = 'output window, operand 0, single buffered']
    %6 = vsyncpa [#allocation3], 0
    %7 = vsyncpa [#allocation4], 0
    // Predicated region
    $region2: #{tpu_custom_call.1} parent=1 // pred_check
      _
    $region3: #{tpu_custom_call.1} parent=1 // pred_check_branch
      %9 = sbr.rel (0) target = $region5
    $region4: #{tpu_custom_call.1} parent=1 // pred_region
      %s11 = ssub.s32 256, 256
      %12 = vsyncadd [#allocation3], %s11
      %s14 = sshll.u32 [#allocation2], 4
      %s15 = int_to_ptr.vmem [resolvable:$true] %s14
      %17 = dma.hbm_to_vmem [thread:$0]  %s0, 256, %s15, [#allocation3]
    $region5: #{tpu_custom_call.1} parent=1 // pred_fallthru
      _
    // Predicated region
    $region6: #{tpu_custom_call.1} parent=1 // pred_check
      _
    $region7: #{tpu_custom_call.1} parent=1 // pred_check_branch
      %19 = sbr.rel (0) target = $region9
    $region8: #{tpu_custom_call.1} parent=1 // pred_region
      %20 = dma.done [#allocation3], 256
    $region9: #{tpu_custom_call.1} parent=1 // pred_fallthru
      _
    %v21 = vld [vmem:[#allocation2] sm:$0xff]
    %v22 = vld [vmem:[#allocation2 + $0x8] sm:$0xff]
    %v23 = vmax.f32 %v21, 0.0
    %v24 = vmax.f32 %v22, 0.0
    %v25 = vmin.f32 %v23, 1.0
    %v26 = vmin.f32 %v24, 1.0
    %27 = vst [vmem:[#allocation5] sm:$0xff] %v25
    %28 = vst [vmem:[#allocation5 + $0x8] sm:$0xff] %v26
    // Predicated region
    $region10: #{tpu_custom_call.1} parent=1 // pred_check
      _
    $region11: #{tpu_custom_call.1} parent=1 // pred_check_branch
      %30 = sbr.rel (0) target = $region13
    $region12: #{tpu_custom_call.1} parent=1 // pred_region
      %s32 = ssub.s32 256, 256
      %33 = vsyncadd [#allocation4], %s32
      %s35 = sshll.u32 [#allocation5], 4
      %s36 = int_to_ptr.vmem [resolvable:$true] %s35
      %38 = dma.vmem_to_hbm [thread:$0]  %s36, 256, %s1, [#allocation4]
    $region13: #{tpu_custom_call.1} parent=1 // pred_fallthru
      _
    // Predicated region
    $region14: #{tpu_custom_call.1} parent=1 // pred_check
      _
    $region15: #{tpu_custom_call.1} parent=1 // pred_check_branch
      %40 = sbr.rel (0) target = $region17
    $region16: #{tpu_custom_call.1} parent=1 // pred_region
      %41 = dma.done [#allocation4], 256
    $region17: #{tpu_custom_call.1} parent=1 // pred_fallthru
      _
    %42 = vsyncpa [#allocation3], 1
    %43 = vsyncpa [#allocation4], 1

</llo_original>
